<compile_context>
chip_gen: v6e
topology: v6e:2x2x1
jax: 0.10.0
libtpu: 0.0.40
codegen_flags: <defaults>
</compile_context>

<pallas_src>
import functools

import jax
import jax.numpy as jnp
from jax.experimental import pallas as pl
from jax.experimental.pallas import tpu as pltpu


def _round_up(x, m):
    return (x + m - 1) // m * m


def _cdiv(a, b):
    return (a + b - 1) // b


def _loss_kernel(area_ref, x_ref, y_ref, out_ref, *, bn, ts, n_true, s_true,
                 inv_count, need_row_mask, need_col_mask):
    """One self-contained grid step: partial = sum_rows((x-y)^2) . area * inv_count."""
    d = x_ref[...].astype(jnp.float32) - y_ref[...].astype(jnp.float32)

    # Mask ragged-edge blocks: OOB region of the last block holds undefined
    # VMEM data and must be zeroed before squaring/summing.
    mask = None
    if need_row_mask:
        row = (jax.lax.broadcasted_iota(jnp.int32, (bn, ts), 0)
               + pl.program_id(1) * bn)
        mask = row < n_true
    if need_col_mask:
        col = (jax.lax.broadcasted_iota(jnp.int32, (bn, ts), 1)
               + pl.program_id(0) * ts)
        cmask = col < s_true
        mask = cmask if mask is None else jnp.logical_and(mask, cmask)
    if mask is not None:
        d = jnp.where(mask, d, 0.0)

    row_sum = jnp.sum(d * d, axis=0, keepdims=True)                # (1, ts) f32
    partial = jnp.sum(row_sum * area_ref[...], keepdims=True)      # (1, 1) f32
    out_ref[...] = (partial * inv_count).reshape(1, 1, 1, 1)


def cell_area_weighted_loss(
    invar,
    outvar,
    area,
    *,
    block_bytes=8 * 1024 * 1024,
    vmem_limit_bytes=48 * 1024 * 1024,
):
    """invar, outvar: [T, C, H, W]; area: [H, W] -> scalar f32 loss (forward only)."""
    T, C, H, W = invar.shape
    assert outvar.shape == invar.shape
    assert area.shape == (H, W)
    N = T * C
    S = H * W

    # Lane-dense flatten (contiguous -> free reshape); inputs stay in native dtype.
    x = invar.reshape(N, S)
    y = outvar.reshape(N, S)
    a = area.reshape(1, S).astype(jnp.float32)

    itemsize = jnp.dtype(x.dtype).itemsize
    # dtype-aware sublane granularity: 8 rows (f32), 16 (bf16), 32 (int8/fp8).
    sub = max(8, 32 // itemsize)
    row_phys = _round_up(S, 128)  # lane-padded physical row length in VMEM

    # Explicit VMEM accounting: 2 inputs x 2 (double buffer) x block
    # + double-buffered area tile (<= block/4) + tiny output + headroom.
    # Clamp so a user-supplied block_bytes cannot overshoot the VMEM limit
    # (v7x has only 64 MiB physical VMEM).
    max_block = (vmem_limit_bytes - (2 << 20)) // 5
    block_bytes = max(min(block_bytes, max_block), 64 * 1024)

    min_block_bytes = sub * row_phys * itemsize
    if min_block_bytes <= block_bytes:
        # Full spatial rows per block; batch as many N rows as the budget allows.
        ts = S
        bn_cap = (block_bytes // (row_phys * itemsize)) // sub * sub
        bn = N if bn_cap >= N else int(bn_cap)   # full dim or multiple of `sub`
    else:
        # Spatial row too large for one block: tile the flat spatial axis with
        # balanced tiles (ragged tail <= 127 lanes instead of up to ts-1).
        bn = min(sub, N)
        ts_max = max(128, (block_bytes // (sub * itemsize)) // 128 * 128)
        n_s_tiles = _cdiv(S, ts_max)
        ts = _round_up(_cdiv(S, n_s_tiles), 128)

    grid = (_cdiv(S, ts), _cdiv(N, bn))
    n_s, n_n = grid

    # Only the tiny area array is ever padded (exact zeros in its ragged tail);
    # x / y stream unpadded and edge blocks are masked inside the kernel.
    s_pad = n_s * ts
    if s_pad != S:
        a = jnp.pad(a, ((0, 0), (0, s_pad - S)))

    kernel = functools.partial(
        _loss_kernel,
        bn=bn, ts=ts, n_true=N, s_true=S,
        inv_count=1.0 / float(N * H * W),
        need_row_mask=(N % bn) != 0,
        need_col_mask=(S % ts) != 0,
    )

    cost = pl.CostEstimate(
        flops=3 * N * S,
        transcendentals=0,
        bytes_accessed=2 * N * S * itemsize + S * 4 + n_s * n_n * 4,
    )

    # Per-step partials -> both grid axes independent ("parallel"); the tiny
    # (n_s, n_n) partial array is summed in the wrapper.
    out = pl.pallas_call(
        kernel,
        out_shape=jax.ShapeDtypeStruct((n_s, n_n, 1, 1), jnp.float32),
        grid_spec=pltpu.PrefetchScalarGridSpec(
            num_scalar_prefetch=0,
            grid=grid,
            in_specs=[
                pl.BlockSpec((1, ts), lambda si, ni: (0, si)),    # area tile
                pl.BlockSpec((bn, ts), lambda si, ni: (ni, si)),  # invar rows
                pl.BlockSpec((bn, ts), lambda si, ni: (ni, si)),  # outvar rows
            ],
            out_specs=pl.BlockSpec((1, 1, 1, 1), lambda si, ni: (si, ni, 0, 0)),
        ),
        compiler_params=pltpu.CompilerParams(
            dimension_semantics=("parallel", "parallel"),
            vmem_limit_bytes=vmem_limit_bytes,
        ),
        cost_estimate=cost,
    )(a, x, y)
    return jnp.sum(out)


def _ref_loss(invar, outvar, area):
    d = invar.astype(jnp.float32) - outvar.astype(jnp.float32)
    return jnp.mean(jnp.mean(d * d, axis=(0, 1)) * area.astype(jnp.float32))


if __name__ == "__main__":
    key = jax.random.PRNGKey(0)

    # (shape, dtype, block_bytes, rtol)
    tests = [
        ((2, 4, 16, 16), jnp.float32, 8 * 1024 * 1024, 1e-5),   # canonical small shape
        ((3, 5, 17, 19), jnp.float32, 8 * 1024 * 1024, 1e-5),   # non-aligned full-dim blocks
        ((9, 3, 64, 80), jnp.float32, 64 * 1024, 1e-4),         # spatial tiling + row/col edge masks
        ((2, 4, 16, 16), jnp.bfloat16, 8 * 1024 * 1024, 1e-5),  # bf16 streaming, 16-row sublanes
    ]

    for i, (shape, dtype, bb, rtol) in enumerate(tests):
        k1, k2, k3 = jax.random.split(jax.random.fold_in(key, i), 3)
        invar = jax.random.normal(k1, shape, dtype=jnp.float32).astype(dtype)
        outvar = jax.random.normal(k2, shape, dtype=jnp.float32).astype(dtype)
        # Deterministic synthetic positive cell-area weights.
        area = jax.nn.softplus(jax.random.normal(k3, shape[2:], dtype=jnp.float32))

        loss = cell_area_weighted_loss(invar, outvar, area, block_bytes=bb)
        loss = jax.block_until_ready(loss)
        ref = _ref_loss(invar, outvar, area)
        assert jnp.allclose(loss, ref, rtol=rtol, atol=1e-6), (shape, dtype, loss, ref)

    print("KERNEL_OK")
</pallas_src>

<mosaic_0001>
module attributes {stable_mosaic.version = 11 : i64} {
  func.func @_loss_kernel(%arg0: i32, %arg1: i32, %arg2: memref<1x256xf32, #tpu.memory_space<vmem>>, %arg3: memref<8x256xf32, #tpu.memory_space<vmem>>, %arg4: memref<8x256xf32, #tpu.memory_space<vmem>>, %arg5: memref<1x1x1x1xf32, #tpu.memory_space<vmem>>) attributes {dimension_semantics = [#tpu.dimension_semantics<parallel>, #tpu.dimension_semantics<parallel>], iteration_bounds = array<i64: 1, 1>, scalar_prefetch = 0 : i64, scratch_operands = 0 : i64, tpu.core_type = #tpu.core_type<tc>, window_params = [{transform_indices = @transform_0, window_bounds = array<i64: 1, 256>}, {transform_indices = @transform_1, window_bounds = array<i64: 8, 256>}, {transform_indices = @transform_2, window_bounds = array<i64: 8, 256>}, {transform_indices = @transform_3, window_bounds = array<i64: 1, 1, 1, 1>}]} {
    %c0 = arith.constant 0 : index
    %c0_0 = arith.constant 0 : index
    %0 = vector.load %arg3[%c0, %c0_0] : memref<8x256xf32, #tpu.memory_space<vmem>>, vector<8x256xf32>
    %c0_1 = arith.constant 0 : index
    %c0_2 = arith.constant 0 : index
    %1 = vector.load %arg4[%c0_1, %c0_2] : memref<8x256xf32, #tpu.memory_space<vmem>>, vector<8x256xf32>
    %2 = arith.subf %0, %1 : vector<8x256xf32>
    %3 = arith.mulf %2, %2 : vector<8x256xf32>
    %cst = arith.constant dense<0.000000e+00> : vector<256xf32>
    %4 = vector.multi_reduction <add>, %3, %cst [0] : vector<8x256xf32> to vector<256xf32>
    %5 = vector.shape_cast %4 : vector<256xf32> to vector<1x256xf32>
    %c0_3 = arith.constant 0 : index
    %c0_4 = arith.constant 0 : index
    %6 = vector.load %arg2[%c0_3, %c0_4] : memref<1x256xf32, #tpu.memory_space<vmem>>, vector<1x256xf32>
    %7 = arith.mulf %5, %6 : vector<1x256xf32>
    %8 = vector.shape_cast %7 : vector<1x256xf32> to vector<1x1x256xf32>
    %cst_5 = arith.constant dense<0.000000e+00> : vector<1xf32>
    %9 = vector.multi_reduction <add>, %8, %cst_5 [1, 2] : vector<1x1x256xf32> to vector<1xf32>
    %10 = vector.shape_cast %9 : vector<1xf32> to vector<1x1x1xf32>
    %11 = vector.extract %10[0, 0, 0] : f32 from vector<1x1x1xf32>
    %12 = vector.broadcast %11 : f32 to vector<1x1xf32>
    %cst_6 = arith.constant 4.8828125E-4 : f32
    %13 = vector.broadcast %cst_6 : f32 to vector<1x1xf32>
    %14 = arith.mulf %12, %13 : vector<1x1xf32>
    %15 = vector.shape_cast %14 : vector<1x1xf32> to vector<1x1x1x1xf32>
    %c0_7 = arith.constant 0 : index
    %c0_8 = arith.constant 0 : index
    %c0_9 = arith.constant 0 : index
    %c0_10 = arith.constant 0 : index
    %16 = vector.load %arg5[%c0_7, %c0_8, %c0_9, %c0_10] : memref<1x1x1x1xf32, #tpu.memory_space<vmem>>, vector<1x1x1x1xf32>
    tpu.vector_store %arg5[%c0_7, %c0_8, %c0_9, %c0_10], %15 {strides = array<i32>} : memref<1x1x1x1xf32, #tpu.memory_space<vmem>>, vector<1x1x1x1xf32>,
    return
  }
  func.func @transform_0(%arg0: i32, %arg1: i32) -> (i32, i32) {
    %c0_i32 = arith.constant 0 : i32
    %c0_i32_0 = arith.constant 0 : i32
    return %c0_i32, %arg0 : i32, i32
  }
  func.func @transform_1(%arg0: i32, %arg1: i32) -> (i32, i32) {
    %c0_i32 = arith.constant 0 : i32
    return %arg1, %arg0 : i32, i32
  }
  func.func @transform_2(%arg0: i32, %arg1: i32) -> (i32, i32) {
    %c0_i32 = arith.constant 0 : i32
    return %arg1, %arg0 : i32, i32
  }
  func.func @transform_3(%arg0: i32, %arg1: i32) -> (i32, i32, i32, i32) {
    %c0_i32 = arith.constant 0 : i32
    %c0_i32_0 = arith.constant 0 : i32
    %c0_i32_1 = arith.constant 0 : i32
    return %arg0, %arg1, %c0_i32, %c0_i32_0 : i32, i32, i32, i32
  }
}

</mosaic_0001>

<llo_original>
// kernel: tpu_custom_call.1
$region0: #{tpu_custom_call.1}
  #allocation0 [shape = 'u32[]', space=smem, size = 0x4, offset = 0x4, fixed_abs, tag = 'smem constant byte address 0x4 - core index']
  #allocation1 [shape = 'u32[144,128]{1,0:T(1,128)}', space=vmem, size = 0x12000, scoped, tag = 'internal scratch']
  %s0 = inlined_call_operand.hbm [shape: f32[1,256], index: 0, kind: input, shape index: {}]
  %s1 = inlined_call_operand.hbm [shape: f32[8,256], index: 1, kind: input, shape index: {}]
  %s2 = inlined_call_operand.hbm [shape: f32[8,256], index: 2, kind: input, shape index: {}]
  %s3 = inlined_call_operand.hbm [shape: f32[1,1,1,1], index: 3, kind: output, shape index: {}]
  %s4 = sld [smem:[#allocation0]]
  $region34: #{tpu_custom_call.1} parent=0
    _
  %s6 = ssub.s32 1, %s4
  %s7 = scalar_select 0, %s6, %s4
  $region1: #{tpu_custom_call.1} parent=0
    #allocation2 [shape = 'u8[1024]{0}', space=vmem, size = 0x400, scoped, tag = 'input window, operand 0, single buffered']
    #allocation3 [shape = 's32[1]{0}', space=sflag, size = 0x4, scoped, tag = 'scoped memory for tpu_custom_call.1']
    #allocation4 [shape = 's32[1]{0}', space=sflag, size = 0x4, scoped, tag = 'scoped memory for tpu_custom_call.1']
    #allocation5 [shape = 'u8[8192]{0}', space=vmem, size = 0x2000, scoped, tag = 'input window, operand 1, single buffered']
    #allocation6 [shape = 's32[1]{0}', space=sflag, size = 0x4, scoped, tag = 'scoped memory for tpu_custom_call.1']
    #allocation7 [shape = 'u8[8192]{0}', space=vmem, size = 0x2000, scoped, tag = 'input window, operand 2, single buffered']
    #allocation8 [shape = 'u8[512]{0}', space=vmem, size = 0x400, scoped, tag = 'output window, operand 0, single buffered']
    %8 = vsyncpa [#allocation3], 0
    %9 = vsyncpa [#allocation6], 0
    %10 = vsyncpa [#allocation4], 0
    // Predicated region
    $region2: #{tpu_custom_call.1} parent=1 // pred_check
      _
    $region3: #{tpu_custom_call.1} parent=1 // pred_check_branch
      %12 = sbr.rel (0) target = $region5
    $region4: #{tpu_custom_call.1} parent=1 // pred_region
      %s14 = ssub.s32 32, 32
      %15 = vsyncadd [#allocation3], %s14
      %s17 = sshll.u32 [#allocation2], 4
      %s18 = int_to_ptr.vmem [resolvable:$true] %s17
      %20 = dma.hbm_to_vmem [thread:$0]  %s0, 32, %s18, [#allocation3]
    $region5: #{tpu_custom_call.1} parent=1 // pred_fallthru
      _
    // Predicated region
    $region6: #{tpu_custom_call.1} parent=1 // pred_check
      _
    $region7: #{tpu_custom_call.1} parent=1 // pred_check_branch
      %22 = sbr.rel (0) target = $region9
    $region8: #{tpu_custom_call.1} parent=1 // pred_region
      %s24 = ssub.s32 256, 256
      %25 = vsyncadd [#allocation6], %s24
      %s27 = sshll.u32 [#allocation5], 4
      %s28 = int_to_ptr.vmem [resolvable:$true] %s27
      %30 = dma.hbm_to_vmem [thread:$0]  %s1, 256, %s28, [#allocation6]
    $region9: #{tpu_custom_call.1} parent=1 // pred_fallthru
      _
    // Predicated region
    $region10: #{tpu_custom_call.1} parent=1 // pred_check
      _
    $region11: #{tpu_custom_call.1} parent=1 // pred_check_branch
      %32 = sbr.rel (0) target = $region13
    $region12: #{tpu_custom_call.1} parent=1 // pred_region
      %s34 = ssub.s32 256, 256
      %35 = vsyncadd [#allocation6], %s34
      %s37 = sshll.u32 [#allocation7], 4
      %s38 = int_to_ptr.vmem [resolvable:$true] %s37
      %40 = dma.hbm_to_vmem [thread:$0]  %s2, 256, %s38, [#allocation6]
    $region13: #{tpu_custom_call.1} parent=1 // pred_fallthru
      _
    // Predicated region
    $region14: #{tpu_custom_call.1} parent=1 // pred_check
      _
    $region15: #{tpu_custom_call.1} parent=1 // pred_check_branch
      %42 = sbr.rel (0) target = $region17
    $region16: #{tpu_custom_call.1} parent=1 // pred_region
      %43 = dma.done [#allocation3], 32
    $region17: #{tpu_custom_call.1} parent=1 // pred_fallthru
      _
    // Predicated region
    $region18: #{tpu_custom_call.1} parent=1 // pred_check
      _
    $region19: #{tpu_custom_call.1} parent=1 // pred_check_branch
      %45 = sbr.rel (0) target = $region21
    $region20: #{tpu_custom_call.1} parent=1 // pred_region
      %46 = dma.done [#allocation6], 256
    $region21: #{tpu_custom_call.1} parent=1 // pred_fallthru
      _
    // Predicated region
    $region22: #{tpu_custom_call.1} parent=1 // pred_check
      _
    $region23: #{tpu_custom_call.1} parent=1 // pred_check_branch
      %48 = sbr.rel (0) target = $region25
    $region24: #{tpu_custom_call.1} parent=1 // pred_region
      %49 = dma.done [#allocation6], 256
    $region25: #{tpu_custom_call.1} parent=1 // pred_fallthru
      _
    %v50 = vld [vmem:[#allocation5] sm:$0xff]
    %v51 = vld [vmem:[#allocation5 + $0x8] sm:$0xff]
    %v52 = vld [vmem:[#allocation7] sm:$0xff]
    %v53 = vld [vmem:[#allocation7 + $0x8] sm:$0xff]
    %v54 = vsub.f32 %v50, %v52
    %v55 = vsub.f32 %v51, %v53
    %v56 = vmul.f32 %v54, %v54
    %v57 = vmul.f32 %v55, %v55
    %v58 = vrot.slane %v56, 4
    %v59 = vadd.f32 %v56, %v58
    %v60 = vrot.slane %v59, 2
    %v61 = vadd.f32 %v59, %v60
    %v62 = vrot.slane %v61, 1
    %v63 = vadd.f32 %v61, %v62
    %v64 = vrot.slane %v57, 4
    %v65 = vadd.f32 %v57, %v64
    %v66 = vrot.slane %v65, 2
    %v67 = vadd.f32 %v65, %v66
    %v68 = vrot.slane %v67, 1
    %v69 = vadd.f32 %v67, %v68
    %v70 = vld [vmem:[#allocation2] sm:$0x3]
    %v72 = vlaneseq
    %v73 = vshrl.u32 %v72, 7
    %v74 = vsub.s32 0, %v73
    %v75 = vrot.slane %v70, %v74
    %v76 = vlaneseq
    %v77 = vshrl.u32 %v76, 7
    %v78 = vsub.s32 1, %v77
    %v79 = vrot.slane %v70, %v78
    %v82 = vmul.f32 %v63, %v75
    %v83 = vmul.f32 %v69, %v79
    %vm84 = vcmask 1040384
    %v85 = vsel %vm84, %v82, 0.0
    %v86 = vsel %vm84, %v83, 0.0
    %v87 = vadd.f32 %v85, %v86
    %88 = vadd.xlane.f32.xlu0 %v87
    %v89 = vpop.xlane.xlu0 %88
    %v90 = vrot.slane %v89, 4
    %v91 = vadd.f32 %v89, %v90
    %v92 = vrot.slane %v91, 2
    %v93 = vadd.f32 %v91, %v92
    %v94 = vrot.slane %v93, 1
    %v95 = vadd.f32 %v93, %v94
    %s96 = vtos %v95
    %v97 = vstv %s96
    %v98 = vmul.f32 %v97, 0.00048828125
    %vm99 = vcmask 0
    %100 = vst.msk [vmem:[#allocation8] sm:$0x1] %vm99, %v98
    // Predicated region
    $region26: #{tpu_custom_call.1} parent=1 // pred_check
      _
    $region27: #{tpu_custom_call.1} parent=1 // pred_check_branch
      %102 = sbr.rel (0) target = $region29
    $region28: #{tpu_custom_call.1} parent=1 // pred_region
      %s104 = ssub.s32 16, 16
      %105 = vsyncadd [#allocation4], %s104
      %s107 = sshll.u32 [#allocation8], 4
      %s108 = int_to_ptr.vmem [resolvable:$true] %s107
      %110 = dma.vmem_to_hbm [thread:$0]  %s108, 16, %s3, [#allocation4]
    $region29: #{tpu_custom_call.1} parent=1 // pred_fallthru
      _
    // Predicated region
    $region30: #{tpu_custom_call.1} parent=1 // pred_check
      _
    $region31: #{tpu_custom_call.1} parent=1 // pred_check_branch
      %112 = sbr.rel (0) target = $region33
    $region32: #{tpu_custom_call.1} parent=1 // pred_region
      %113 = dma.done [#allocation4], 16
    $region33: #{tpu_custom_call.1} parent=1 // pred_fallthru
      _
    %114 = vsyncpa [#allocation3], 1
    %115 = vsyncpa [#allocation6], 1
    %116 = vsyncpa [#allocation4], 1

</llo_original>
